<compile_context>
chip_gen: v5e
topology: v5e:2x2
jax: 0.10.0
libtpu: 0.0.40
codegen_flags: <defaults>
</compile_context>

<pallas_src>
import jax
import jax.numpy as jnp
from jax.experimental import pallas as pl
from jax.experimental.pallas import tpu as pltpu


# ---- packed-parameter slab layout (rows of a (192, 128) f32 array) ---------
_W1_R0, _W1_R1 = 0, 32      # block-diag layer-1 weight [[Ws,0],[0,Wa]] (32,128)
_B1_ROW = 32                # layer-1 bias row [bs | ba]
_WQ_R0, _WQ_R1 = 40, 168    # fc_q weight, zero-padded to (128,128)
_BQ_ROW = 168               # fc_q bias (lanes 0..63)
_WF_ROW = 176               # folded (Wo @ Wo2) weight stored as a row (lanes 0..63)
_BF_ROW = 184               # folded bias (bo @ Wo2 + bo2) at lane 0
_SLAB_ROWS = 192            # multiple of 8

_IN_WIDTH = 32              # [x(24) | a(4) | zero-pad(4)]
_MAX_BLOCK_B = 512          # batch tile for large-batch training


def qnet_kernel(xa_ref, p_ref, out_ref):
    f32 = jnp.float32
    xa = xa_ref[...]                               # (TB, 32) = [x | a | 0-pad]
    w1 = p_ref[_W1_R0:_W1_R1, :]                   # (32, 128)
    b1 = p_ref[_B1_ROW:_B1_ROW + 1, :]             # (1, 128)
    wq = p_ref[_WQ_R0:_WQ_R1, :]                   # (128, 128)
    bq = p_ref[_BQ_ROW:_BQ_ROW + 1, :]             # (1, 128)
    wf = p_ref[_WF_ROW:_WF_ROW + 1, :]             # (1, 128)
    bf = p_ref[_BF_ROW:_BF_ROW + 1, :]             # (1, 128), bias at lane 0

    # h = [relu(x@Ws+bs) | relu(a@Wa+ba)] -- one fused MXU matmul (TB,32)@(32,128)
    h = jnp.maximum(jnp.dot(xa, w1, preferred_element_type=f32) + b1, 0.0)
    # g = relu(cat([h1,h2]) @ Wq + bq); lanes 64..127 are exactly 0 by construction.
    g = jnp.maximum(jnp.dot(h, wq, preferred_element_type=f32) + bq, 0.0)
    # q = g @ (Wo@Wo2) + (bo@Wo2 + bo2)  as VPU multiply + cross-lane (XLU) reduce.
    out_ref[...] = jnp.sum(g * wf + bf, axis=1, keepdims=True)


def pack_params(params):
    """One-time pack of all QNet parameters into a single (192,128) VMEM slab."""
    ws, bs, wa, ba, wq, bq, wo, bo, wo2, bo2 = params
    slab = jnp.zeros((_SLAB_ROWS, 128), jnp.float32)
    # layer 1: block-diagonal fc_s / fc_a
    slab = slab.at[0:24, 0:64].set(ws)
    slab = slab.at[24:28, 64:128].set(wa)
    slab = slab.at[_B1_ROW, 0:64].set(bs)
    slab = slab.at[_B1_ROW, 64:128].set(ba)
    # layer 2: fc_q (zero-padded output lanes 64..127)
    slab = slab.at[_WQ_R0:_WQ_R1, 0:64].set(wq)
    slab = slab.at[_BQ_ROW, 0:64].set(bq)
    # folded fc_out o fc_out2
    wf = (wo @ wo2).reshape(-1)        # (64,)
    bf = bo @ wo2 + bo2                # (1,)
    slab = slab.at[_WF_ROW, 0:64].set(wf)
    slab = slab.at[_BF_ROW, 0].set(bf[0])
    return slab


def _round_up(n, m):
    return (n + m - 1) // m * m


def qnet_forward(x, a, slab):
    """Pads/concatenates inputs and runs the fused QNet Pallas kernel."""
    B = x.shape[0]
    feat_pad = jnp.zeros((B, _IN_WIDTH - x.shape[1] - a.shape[1]), jnp.float32)
    xa = jnp.concatenate(
        [x.astype(jnp.float32), a.astype(jnp.float32), feat_pad], axis=1)

    # Batch tiling: pad rows to a multiple of 8 (sublane), tile at <=512 rows.
    bp = _round_up(B, 8)
    tb = bp if bp <= _MAX_BLOCK_B else _MAX_BLOCK_B
    bp = _round_up(bp, tb)
    if bp != B:
        xa = jnp.pad(xa, ((0, bp - B), (0, 0)))

    out = pl.pallas_call(
        qnet_kernel,
        out_shape=jax.ShapeDtypeStruct((bp, 1), jnp.float32),
        grid=(bp // tb,),
        in_specs=[
            pl.BlockSpec((tb, _IN_WIDTH), lambda i: (i, 0)),
            # constant index_map -> slab stays resident in VMEM (one DMA total)
            pl.BlockSpec((_SLAB_ROWS, 128), lambda i: (0, 0)),
        ],
        out_specs=pl.BlockSpec((tb, 1), lambda i: (i, 0)),
        compiler_params=pltpu.CompilerParams(
            dimension_semantics=("parallel",)),
    )(xa, slab)
    return out[:B]


# jit so the tiny input concat/pad fuses with the pallas_call launch.
qnet_apply = jax.jit(qnet_forward)


def qnet_reference(x, a, params):
    (ws, bs, wa, ba, wq, bq, wo, bo, wo2, bo2) = params
    h1 = jax.nn.relu(x @ ws + bs)
    h2 = jax.nn.relu(a @ wa + ba)
    cat = jnp.concatenate([h1, h2], axis=1)
    q = jax.nn.relu(cat @ wq + bq)
    q = q @ wo + bo
    q = q @ wo2 + bo2
    return q


def init_params(key):
    """Deterministic init mirroring nn.Linear shapes; weights stored as
    (in_features, out_features)."""
    def linear(key, fan_in, fan_out):
        kw, kb = jax.random.split(key)
        bound = 1.0 / jnp.sqrt(jnp.float32(fan_in))
        w = jax.random.uniform(kw, (fan_in, fan_out), jnp.float32, -bound, bound)
        b = jax.random.uniform(kb, (fan_out,), jnp.float32, -bound, bound)
        return w, b

    k1, k2, k3, k4, k5 = jax.random.split(key, 5)
    ws, bs = linear(k1, 24, 64)    # fc_s
    wa, ba = linear(k2, 4, 64)     # fc_a
    wq, bq = linear(k3, 128, 64)   # fc_q
    wo, bo = linear(k4, 64, 32)    # fc_out
    wo2, bo2 = linear(k5, 32, 1)   # fc_out2
    return (ws, bs, wa, ba, wq, bq, wo, bo, wo2, bo2)


if __name__ == "__main__":
    key = jax.random.PRNGKey(0)
    kx, ka, kp = jax.random.split(key, 3)

    B = 8
    x = jax.random.normal(kx, (B, 24), jnp.float32)   # state
    a = jax.random.normal(ka, (B, 4), jnp.float32)    # action
    params = init_params(kp)

    # one-time parameter pack (not on the per-call path)
    slab = jax.block_until_ready(pack_params(params))

    out = qnet_apply(x, a, slab)
    out = jax.block_until_ready(out)

    ref = qnet_reference(x, a, params)
    assert out.shape == (B, 1), out.shape
    assert jnp.allclose(out, ref, atol=1e-5, rtol=1e-5), (out, ref)

    print("KERNEL_OK")
</pallas_src>

<mosaic_0001>
module attributes {stable_mosaic.version = 11 : i64} {
  func.func @qnet_kernel(%arg0: i32, %arg1: memref<8x32xf32, #tpu.memory_space<vmem>>, %arg2: memref<192x128xf32, #tpu.memory_space<vmem>>, %arg3: memref<8x1xf32, #tpu.memory_space<vmem>>) attributes {dimension_semantics = [#tpu.dimension_semantics<parallel>], iteration_bounds = array<i64: 1>, scalar_prefetch = 0 : i64, scratch_operands = 0 : i64, tpu.core_type = #tpu.core_type<tc>, window_params = [{transform_indices = @transform_0, window_bounds = array<i64: 8, 32>}, {pipeline_mode = #tpu.pipeline_mode<synchronous>, transform_indices = @transform_1, window_bounds = array<i64: 192, 128>}, {transform_indices = @transform_2, window_bounds = array<i64: 8, 1>}]} {
    %c0 = arith.constant 0 : index
    %c0_0 = arith.constant 0 : index
    %0 = vector.load %arg1[%c0, %c0_0] : memref<8x32xf32, #tpu.memory_space<vmem>>, vector<8x32xf32>
    %c0_1 = arith.constant 0 : index
    %c0_2 = arith.constant 0 : index
    %1 = vector.load %arg2[%c0_1, %c0_2] : memref<192x128xf32, #tpu.memory_space<vmem>>, vector<32x128xf32>
    %c32 = arith.constant 32 : index
    %c0_3 = arith.constant 0 : index
    %2 = vector.load %arg2[%c32, %c0_3] : memref<192x128xf32, #tpu.memory_space<vmem>>, vector<1x128xf32>
    %c40 = arith.constant 40 : index
    %c0_4 = arith.constant 0 : index
    %3 = vector.load %arg2[%c40, %c0_4] : memref<192x128xf32, #tpu.memory_space<vmem>>, vector<128x128xf32>
    %c168 = arith.constant 168 : index
    %c0_5 = arith.constant 0 : index
    %4 = vector.load %arg2[%c168, %c0_5] : memref<192x128xf32, #tpu.memory_space<vmem>>, vector<1x128xf32>
    %c176 = arith.constant 176 : index
    %c0_6 = arith.constant 0 : index
    %5 = vector.load %arg2[%c176, %c0_6] : memref<192x128xf32, #tpu.memory_space<vmem>>, vector<1x128xf32>
    %c184 = arith.constant 184 : index
    %c0_7 = arith.constant 0 : index
    %6 = vector.load %arg2[%c184, %c0_7] : memref<192x128xf32, #tpu.memory_space<vmem>>, vector<1x128xf32>
    %cst = arith.constant dense<0.000000e+00> : vector<8x128xf32>
    %7 = tpu.matmul %0, %1, %cst {dimension_numbers = #tpu.dot_dimension_numbers<[1], [0], [0], [1], [0, 0, 1, 1], [], []>} : vector<8x32xf32>, vector<32x128xf32>, vector<8x128xf32> -> vector<8x128xf32>
    %8 = vector.broadcast %2 : vector<1x128xf32> to vector<8x128xf32>
    %9 = arith.addf %7, %8 : vector<8x128xf32>
    %cst_8 = arith.constant 0.000000e+00 : f32
    %10 = vector.broadcast %cst_8 : f32 to vector<8x128xf32>
    %11 = arith.maximumf %9, %10 : vector<8x128xf32>
    %cst_9 = arith.constant dense<0.000000e+00> : vector<8x128xf32>
    %12 = tpu.matmul %11, %3, %cst_9 {dimension_numbers = #tpu.dot_dimension_numbers<[1], [0], [0], [1], [0, 0, 1, 1], [], []>} : vector<8x128xf32>, vector<128x128xf32>, vector<8x128xf32> -> vector<8x128xf32>
    %13 = vector.broadcast %4 : vector<1x128xf32> to vector<8x128xf32>
    %14 = arith.addf %12, %13 : vector<8x128xf32>
    %cst_10 = arith.constant 0.000000e+00 : f32
    %15 = vector.broadcast %cst_10 : f32 to vector<8x128xf32>
    %16 = arith.maximumf %14, %15 : vector<8x128xf32>
    %17 = vector.broadcast %5 : vector<1x128xf32> to vector<8x128xf32>
    %18 = arith.mulf %16, %17 : vector<8x128xf32>
    %19 = vector.broadcast %6 : vector<1x128xf32> to vector<8x128xf32>
    %20 = arith.addf %18, %19 : vector<8x128xf32>
    %cst_11 = arith.constant dense<0.000000e+00> : vector<8xf32>
    %21 = vector.multi_reduction <add>, %20, %cst_11 [1] : vector<8x128xf32> to vector<8xf32>
    %22 = vector.shape_cast %21 : vector<8xf32> to vector<8x1xf32>
    %c0_12 = arith.constant 0 : index
    %c0_13 = arith.constant 0 : index
    %23 = vector.load %arg3[%c0_12, %c0_13] : memref<8x1xf32, #tpu.memory_space<vmem>>, vector<8x1xf32>
    tpu.vector_store %arg3[%c0_12, %c0_13], %22 {strides = array<i32>} : memref<8x1xf32, #tpu.memory_space<vmem>>, vector<8x1xf32>,
    return
  }
  func.func @transform_0(%arg0: i32) -> (i32, i32) {
    %c0_i32 = arith.constant 0 : i32
    %c0_i32_0 = arith.constant 0 : i32
    return %arg0, %c0_i32 : i32, i32
  }
  func.func @transform_1(%arg0: i32) -> (i32, i32) {
    %c0_i32 = arith.constant 0 : i32
    %c0_i32_0 = arith.constant 0 : i32
    %c0_i32_1 = arith.constant 0 : i32
    return %c0_i32, %c0_i32_0 : i32, i32
  }
  func.func @transform_2(%arg0: i32) -> (i32, i32) {
    %c0_i32 = arith.constant 0 : i32
    %c0_i32_0 = arith.constant 0 : i32
    return %arg0, %c0_i32 : i32, i32
  }
}

</mosaic_0001>

<llo_original>
// kernel: qnet_forward.1
$region0: #{qnet_forward.1}
  #allocation0 [shape = 'u32[]', space=smem, size = 0x4, offset = 0x4, fixed_abs, tag = 'smem constant byte address 0x4 - core index']
  #allocation1 [shape = 'u32[72,128]{1,0:T(1,128)}', space=vmem, size = 0x9000, scoped, tag = 'internal scratch']
  %s0 = inlined_call_operand.vmem [shape: f32[8,32], index: 0, kind: input, shape index: {}]
  %s1 = inlined_call_operand.hbm [shape: f32[192,128], index: 1, kind: input, shape index: {}]
  %s2 = inlined_call_operand.vmem [shape: f32[8,1], index: 2, kind: output, shape index: {}]
  %s3 = sld [smem:[#allocation0]]
  $region22: #{qnet_forward.1} parent=0
    _
  %s5 = ssub.s32 1, %s3
  %s6 = scalar_select 0, %s5, %s3
  $region1: #{qnet_forward.1} parent=0
    #allocation2 [shape = 'u8[98304]{0}', space=vmem, size = 0x18000, scoped, tag = 'input window, operand 1, single buffered']
    #allocation3 [shape = 's32[1]{0}', space=sflag, size = 0x4, scoped, tag = 'scoped memory for qnet_forward.1']
    %7 = vsyncpa [#allocation3], 0
    // Predicated region
    $region2: #{qnet_forward.1} parent=1 // pred_check
      _
    $region3: #{qnet_forward.1} parent=1 // pred_check_branch
      %9 = sbr.rel (0) target = $region5
    $region4: #{qnet_forward.1} parent=1 // pred_region
      _
    $region5: #{qnet_forward.1} parent=1 // pred_fallthru
      _
    // Predicated region
    $region6: #{qnet_forward.1} parent=1 // pred_check
      _
    $region7: #{qnet_forward.1} parent=1 // pred_check_branch
      %11 = sbr.rel (0) target = $region9
    $region8: #{qnet_forward.1} parent=1 // pred_region
      %13 = vsyncadd [#allocation3], 0
      %s14 = sshll.u32 %s1, 4
      %s15 = int_to_ptr.hbm [resolvable:$true] %s14
      %s16 = sshll.u32 [#allocation2], 4
      %s17 = int_to_ptr.vmem [resolvable:$true] %s16
      %22 = dma.hbm_to_vmem [thread:$0]  %s15, 3072, %s17, [#allocation3], 128, 128, 8
    $region9: #{qnet_forward.1} parent=1 // pred_fallthru
      _
    // Predicated region
    $region10: #{qnet_forward.1} parent=1 // pred_check
      _
    $region11: #{qnet_forward.1} parent=1 // pred_check_branch
      %24 = sbr.rel (0) target = $region13
    $region12: #{qnet_forward.1} parent=1 // pred_region
      %26 = dma.done [#allocation3], 3072
    $region13: #{qnet_forward.1} parent=1 // pred_fallthru
      _
    %v27 = vld [vmem:[%s0] sm:$0xff]
    %v28 = vld [vmem:[#allocation2] sm:$0xff]
    %v29 = vld [vmem:[#allocation2 + $0x8] sm:$0xff]
    %v30 = vld [vmem:[#allocation2 + $0x10] sm:$0xff]
    %v31 = vld [vmem:[#allocation2 + $0x18] sm:$0xff]
    %v32 = vld [vmem:[#allocation2 + $0x20] sm:$0x1]
    %v33 = vld [vmem:[#allocation2 + $0x28] sm:$0xff]
    %v34 = vld [vmem:[#allocation2 + $0x30] sm:$0xff]
    %v35 = vld [vmem:[#allocation2 + $0x38] sm:$0xff]
    %v36 = vld [vmem:[#allocation2 + $0x40] sm:$0xff]
    %v37 = vld [vmem:[#allocation2 + $0x48] sm:$0xff]
    %v38 = vld [vmem:[#allocation2 + $0x50] sm:$0xff]
    %v39 = vld [vmem:[#allocation2 + $0x58] sm:$0xff]
    %v40 = vld [vmem:[#allocation2 + $0x60] sm:$0xff]
    %v41 = vld [vmem:[#allocation2 + $0x68] sm:$0xff]
    %v42 = vld [vmem:[#allocation2 + $0x70] sm:$0xff]
    %v43 = vld [vmem:[#allocation2 + $0x78] sm:$0xff]
    %v44 = vld [vmem:[#allocation2 + $0x80] sm:$0xff]
    %v45 = vld [vmem:[#allocation2 + $0x88] sm:$0xff]
    %v46 = vld [vmem:[#allocation2 + $0x90] sm:$0xff]
    %v47 = vld [vmem:[#allocation2 + $0x98] sm:$0xff]
    %v48 = vld [vmem:[#allocation2 + $0xa0] sm:$0xff]
    %v49 = vld [vmem:[#allocation2 + $0xa8] sm:$0x1]
    %v50 = vld [vmem:[#allocation2 + $0xb0] sm:$0x1]
    %v51 = vld [vmem:[#allocation2 + $0xb8] sm:$0x1]
    %v52 = vperm.slane %v32, 0
    %vm53 = vcmask 261120
    %v55 = vsel %vm53, %v27, 0
    %57 = vmatpush.msra.mxu0 0.0
    %58 = vmatpush.msra.mxu0 0.0
    %59 = vmatpush.msra.mxu0 0.0
    %60 = vmatpush.msra.mxu0 0.0
    %61 = vmatpush.msra.mxu0 0.0
    %62 = vmatpush.msra.mxu0 0.0
    %63 = vmatpush.msra.mxu0 0.0
    %64 = vmatpush.msra.mxu0 0.0
    %65 = vmatpush.msra.mxu0 0.0
    %66 = vmatpush.msra.mxu0 0.0
    %67 = vmatpush.msra.mxu0 0.0
    %68 = vmatpush.msra.mxu0 0.0
    %69 = vmatpush.msra.mxu0 %v31
    %70 = vmatpush.msra.mxu0 %v30
    %71 = vmatpush.msra.mxu0 %v29
    %72 = vmatpush.msra.mxu0 %v28
    %73 = vmatmul.f32.gmra.mxu0 %v55
    %v74 = vpop.f32.mrf.mxu0
    %v75 = vadd.f32 %v52, %v74
    %76 = vdwg.mxu0
    %v77 = vmax.f32 %v75, 0.0
    %v78 = vperm.slane %v49, 0
    %79 = vmatpush.msra.mxu0 %v48
    %80 = vmatpush.msra.mxu0 %v47
    %81 = vmatpush.msra.mxu0 %v46
    %82 = vmatpush.msra.mxu0 %v45
    %83 = vmatpush.msra.mxu0 %v44
    %84 = vmatpush.msra.mxu0 %v43
    %85 = vmatpush.msra.mxu0 %v42
    %86 = vmatpush.msra.mxu0 %v41
    %87 = vmatpush.msra.mxu0 %v40
    %88 = vmatpush.msra.mxu0 %v39
    %89 = vmatpush.msra.mxu0 %v38
    %90 = vmatpush.msra.mxu0 %v37
    %91 = vmatpush.msra.mxu0 %v36
    %92 = vmatpush.msra.mxu0 %v35
    %93 = vmatpush.msra.mxu0 %v34
    %94 = vmatpush.msra.mxu0 %v33
    %95 = vmatmul.f32.gmra.mxu0 %v77
    %v96 = vpop.f32.mrf.mxu0
    %v97 = vadd.f32 %v78, %v96
    %98 = vdwg.mxu0
    %v99 = vmax.f32 %v97, 0.0
    %v100 = vperm.slane %v50, 0
    %v101 = vmul.f32 %v99, %v100
    %v102 = vperm.slane %v51, 0
    %v103 = vadd.f32 %v101, %v102
    %104 = vadd.xlane.f32.xlu0 %v103
    %v105 = vpop.xlane.xlu0 %104
    %vm106 = vcmask 7168
    %107 = vst.msk [vmem:[%s2] sm:$0xff] %vm106, %v105
    // Predicated region
    $region14: #{qnet_forward.1} parent=1 // pred_check
      _
    $region15: #{qnet_forward.1} parent=1 // pred_check_branch
      %109 = sbr.rel (0) target = $region17
    $region16: #{qnet_forward.1} parent=1 // pred_region
      _
    $region17: #{qnet_forward.1} parent=1 // pred_fallthru
      _
    // Predicated region
    $region18: #{qnet_forward.1} parent=1 // pred_check
      _
    $region19: #{qnet_forward.1} parent=1 // pred_check_branch
      %111 = sbr.rel (0) target = $region21
    $region20: #{qnet_forward.1} parent=1 // pred_region
      _
    $region21: #{qnet_forward.1} parent=1 // pred_fallthru
      _
    %112 = vsyncpa [#allocation3], 1

</llo_original>
